<compile_context>
chip_gen: v7x
topology: tpu7x:2x2x1
jax: 0.10.0
libtpu: 0.0.40
codegen_flags: <defaults>
</compile_context>

<pallas_src>
import jax
import jax.numpy as jnp
import numpy as np
from jax.experimental import pallas as pl
from jax.experimental.pallas import tpu as pltpu


def _dwt_kernel(x_ref, c_ref, o_ref):
    """x_ref: (Th, 2W)  lanes = [row 2i pixels | row 2i+1 pixels] for Th row pairs.
    c_ref: (W, 2*Wh)  column butterfly: first Wh cols = 0.5*(pair sum),
                       last Wh cols = 0.5*(odd col - even col).
    o_ref: (4, Th, Wh) subbands in order [LL, HL, LH, HH]."""
    two_w = x_ref.shape[-1]
    W = two_w // 2
    wh = o_ref.shape[-1]

    xv = x_ref[...]
    xe = xv[:, :W]          # even image rows (raw pixels)
    xo = xv[:, W:]          # odd image rows

    s = xe + xo             # per-column row-pair sum
    d = xo - xe             # per-column row-pair difference

    cmat = c_ref[...]
    u = jnp.dot(s, cmat, preferred_element_type=jnp.float32)   # (Th, 2Wh): [LL | HL]
    v = jnp.dot(d, cmat, preferred_element_type=jnp.float32)   # (Th, 2Wh): [LH | HH]

    o_ref[0] = u[:, :wh].astype(o_ref.dtype)   # LL =  x1 + x2 + x3 + x4
    o_ref[1] = u[:, wh:].astype(o_ref.dtype)   # HL = -x1 - x2 + x3 + x4
    o_ref[2] = v[:, :wh].astype(o_ref.dtype)   # LH = -x1 + x2 - x3 + x4
    o_ref[3] = v[:, wh:].astype(o_ref.dtype)   # HH =  x1 - x2 - x3 + x4


def _row_tile(hh, row_bytes):
    """Row-pairs per grid step: ~512 KiB input block, multiple of 8 (or full Hh)."""
    target = max(8, (512 * 1024) // max(1, row_bytes))
    if hh <= target:
        return hh
    # prefer an exact multiple-of-8 divisor to avoid padded edge blocks
    for cand in range((target // 8) * 8, 7, -8):
        if hh % cand == 0:
            return cand
    return (target // 8) * 8   # non-dividing: OOB input rows only feed discarded rows


@jax.jit
def dwt_forward(x_nchw):
    """Haar DWT matching dwt_init: (N, C, H, W) -> (N, 4C, H//2, W//2)."""
    N, C, H, W = x_nchw.shape
    assert H % 2 == 0 and W % 2 == 0, "DWT needs even spatial dims"
    Hh, Wh = H // 2, W // 2
    dt = x_nchw.dtype

    # FREE contiguous reshape: xr[n, c, i, :W] = x[n, c, 2i, :], xr[n, c, i, W:] = x[n, c, 2i+1, :]
    xr = x_nchw.reshape(N, C, Hh, 2 * W)

    # Constant column-butterfly matrix (W, 2*Wh), DMA'd to VMEM once and kept resident.
    w_idx = jnp.arange(W)[:, None]
    j_idx = jnp.arange(Wh)[None, :]
    hit = (w_idx // 2) == j_idx
    csum = jnp.where(hit, 0.5, 0.0)                                   # 0.5*(even + odd col)
    cdif = jnp.where(hit, jnp.where(w_idx % 2 == 1, 0.5, -0.5), 0.0)  # 0.5*(odd - even col)
    cmat = jnp.concatenate([csum, cdif], axis=1).astype(dt)           # (W, 2*Wh)

    th = _row_tile(Hh, 2 * W * x_nchw.dtype.itemsize)
    grid = (N, C, pl.cdiv(Hh, th))

    out = pl.pallas_call(
        _dwt_kernel,
        out_shape=jax.ShapeDtypeStruct((N, 4, C, Hh, Wh), dt),
        grid_spec=pltpu.PrefetchScalarGridSpec(
            num_scalar_prefetch=0,
            grid=grid,
            in_specs=[
                pl.BlockSpec((None, None, th, 2 * W),
                             lambda n, c, r: (n, c, r, 0)),
                pl.BlockSpec((W, 2 * Wh),
                             lambda n, c, r: (0, 0)),
            ],
            out_specs=pl.BlockSpec((None, 4, None, th, Wh),
                                   lambda n, c, r: (n, 0, c, r, 0)),
        ),
        compiler_params=pltpu.CompilerParams(
            dimension_semantics=("parallel", "parallel", "parallel")),
    )(xr, cmat)

    # (N, 4, C, Hh, Wh) -> (N, 4C, Hh, Wh): free reshape, channel = subband*C + c,
    # identical to torch.cat((LL, HL, LH, HH), dim=1).
    return out.reshape(N, 4 * C, Hh, Wh)


def _ref_dwt(x):
    """Pure-JAX reference: verbatim port of dwt_init (NCHW)."""
    x01 = x[:, :, 0::2, :] / 2
    x02 = x[:, :, 1::2, :] / 2
    x1 = x01[:, :, :, 0::2]
    x2 = x02[:, :, :, 0::2]
    x3 = x01[:, :, :, 1::2]
    x4 = x02[:, :, :, 1::2]
    x_LL = x1 + x2 + x3 + x4
    x_HL = -x1 - x2 + x3 + x4
    x_LH = -x1 + x2 - x3 + x4
    x_HH = x1 - x2 - x3 + x4
    return jnp.concatenate((x_LL, x_HL, x_LH, x_HH), axis=1)


if __name__ == "__main__":
    key = jax.random.PRNGKey(0)

    # Primary test: PyTorch-style NCHW input (values rounded to multiples of 1/8 so the
    # check is exact regardless of the MXU's f32 emulation path).
    k1, k2 = jax.random.split(key)
    x = jnp.round(jax.random.normal(k1, (2, 4, 16, 16), jnp.float32) * 8.0) / 8.0
    out = dwt_forward(x)
    jax.block_until_ready(out)
    np.testing.assert_allclose(np.asarray(out), np.asarray(_ref_dwt(x)),
                               rtol=1e-6, atol=1e-6)

    # Secondary test: the actual gray-image use case (N=1, C=1).
    x2 = jnp.round(jax.random.normal(k2, (1, 1, 32, 32), jnp.float32) * 8.0) / 8.0
    out2 = dwt_forward(x2)
    jax.block_until_ready(out2)
    np.testing.assert_allclose(np.asarray(out2), np.asarray(_ref_dwt(x2)),
                               rtol=1e-6, atol=1e-6)

    print("KERNEL_OK")
</pallas_src>

<mosaic_0001>
module attributes {stable_mosaic.version = 11 : i64} {
  func.func @_dwt_kernel(%arg0: i32, %arg1: i32, %arg2: i32, %arg3: memref<1x1x8x32xf32, #tpu.memory_space<vmem>>, %arg4: memref<16x16xf32, #tpu.memory_space<vmem>>, %arg5: memref<1x4x1x8x8xf32, #tpu.memory_space<vmem>>) attributes {dimension_semantics = [#tpu.dimension_semantics<parallel>, #tpu.dimension_semantics<parallel>, #tpu.dimension_semantics<parallel>], iteration_bounds = array<i64: 2, 4, 1>, scalar_prefetch = 0 : i64, scratch_operands = 0 : i64, tpu.core_type = #tpu.core_type<tc>, window_params = [{transform_indices = @transform_0, window_bounds = array<i64: 1, 1, 8, 32>}, {pipeline_mode = #tpu.pipeline_mode<synchronous>, transform_indices = @transform_1, window_bounds = array<i64: 16, 16>}, {transform_indices = @transform_2, window_bounds = array<i64: 1, 4, 1, 8, 8>}]} {
    %c0 = arith.constant 0 : index
    %c0_0 = arith.constant 0 : index
    %c0_1 = arith.constant 0 : index
    %c0_2 = arith.constant 0 : index
    %0 = vector.load %arg3[%c0, %c0_0, %c0_1, %c0_2] : memref<1x1x8x32xf32, #tpu.memory_space<vmem>>, vector<1x1x8x32xf32>
    %1 = vector.shape_cast %0 : vector<1x1x8x32xf32> to vector<8x32xf32>
    %2 = vector.extract_strided_slice %1 {offsets = [0, 0], sizes = [8, 16], strides = [1, 1]} : vector<8x32xf32> to vector<8x16xf32>
    %3 = vector.extract_strided_slice %1 {offsets = [0, 16], sizes = [8, 16], strides = [1, 1]} : vector<8x32xf32> to vector<8x16xf32>
    %4 = arith.addf %2, %3 : vector<8x16xf32>
    %5 = arith.subf %3, %2 : vector<8x16xf32>
    %c0_3 = arith.constant 0 : index
    %c0_4 = arith.constant 0 : index
    %6 = vector.load %arg4[%c0_3, %c0_4] : memref<16x16xf32, #tpu.memory_space<vmem>>, vector<16x16xf32>
    %cst = arith.constant dense<0.000000e+00> : vector<8x16xf32>
    %7 = tpu.matmul %4, %6, %cst {dimension_numbers = #tpu.dot_dimension_numbers<[1], [0], [0], [1], [0, 0, 1, 1], [], []>} : vector<8x16xf32>, vector<16x16xf32>, vector<8x16xf32> -> vector<8x16xf32>
    %cst_5 = arith.constant dense<0.000000e+00> : vector<8x16xf32>
    %8 = tpu.matmul %5, %6, %cst_5 {dimension_numbers = #tpu.dot_dimension_numbers<[1], [0], [0], [1], [0, 0, 1, 1], [], []>} : vector<8x16xf32>, vector<16x16xf32>, vector<8x16xf32> -> vector<8x16xf32>
    %9 = vector.extract_strided_slice %7 {offsets = [0, 0], sizes = [8, 8], strides = [1, 1]} : vector<8x16xf32> to vector<8x8xf32>
    %c0_6 = arith.constant 0 : index
    %c0_7 = arith.constant 0 : index
    %c0_8 = arith.constant 0 : index
    %c0_9 = arith.constant 0 : index
    %c0_10 = arith.constant 0 : index
    %10 = vector.load %arg5[%c0_6, %c0_7, %c0_8, %c0_9, %c0_10] : memref<1x4x1x8x8xf32, #tpu.memory_space<vmem>>, vector<1x1x1x8x8xf32>
    %11 = vector.shape_cast %10 : vector<1x1x1x8x8xf32> to vector<8x8xf32>
    %12 = vector.shape_cast %9 : vector<8x8xf32> to vector<1x1x1x8x8xf32>
    tpu.vector_store %arg5[%c0_6, %c0_7, %c0_8, %c0_9, %c0_10], %12 {strides = array<i32>} : memref<1x4x1x8x8xf32, #tpu.memory_space<vmem>>, vector<1x1x1x8x8xf32>,
    %13 = vector.extract_strided_slice %7 {offsets = [0, 8], sizes = [8, 8], strides = [1, 1]} : vector<8x16xf32> to vector<8x8xf32>
    %c0_11 = arith.constant 0 : index
    %c1 = arith.constant 1 : index
    %c0_12 = arith.constant 0 : index
    %c0_13 = arith.constant 0 : index
    %c0_14 = arith.constant 0 : index
    %14 = vector.load %arg5[%c0_11, %c1, %c0_12, %c0_13, %c0_14] : memref<1x4x1x8x8xf32, #tpu.memory_space<vmem>>, vector<1x1x1x8x8xf32>
    %15 = vector.shape_cast %14 : vector<1x1x1x8x8xf32> to vector<8x8xf32>
    %16 = vector.shape_cast %13 : vector<8x8xf32> to vector<1x1x1x8x8xf32>
    tpu.vector_store %arg5[%c0_11, %c1, %c0_12, %c0_13, %c0_14], %16 {strides = array<i32>} : memref<1x4x1x8x8xf32, #tpu.memory_space<vmem>>, vector<1x1x1x8x8xf32>,
    %17 = vector.extract_strided_slice %8 {offsets = [0, 0], sizes = [8, 8], strides = [1, 1]} : vector<8x16xf32> to vector<8x8xf32>
    %c0_15 = arith.constant 0 : index
    %c2 = arith.constant 2 : index
    %c0_16 = arith.constant 0 : index
    %c0_17 = arith.constant 0 : index
    %c0_18 = arith.constant 0 : index
    %18 = vector.load %arg5[%c0_15, %c2, %c0_16, %c0_17, %c0_18] : memref<1x4x1x8x8xf32, #tpu.memory_space<vmem>>, vector<1x1x1x8x8xf32>
    %19 = vector.shape_cast %18 : vector<1x1x1x8x8xf32> to vector<8x8xf32>
    %20 = vector.shape_cast %17 : vector<8x8xf32> to vector<1x1x1x8x8xf32>
    tpu.vector_store %arg5[%c0_15, %c2, %c0_16, %c0_17, %c0_18], %20 {strides = array<i32>} : memref<1x4x1x8x8xf32, #tpu.memory_space<vmem>>, vector<1x1x1x8x8xf32>,
    %21 = vector.extract_strided_slice %8 {offsets = [0, 8], sizes = [8, 8], strides = [1, 1]} : vector<8x16xf32> to vector<8x8xf32>
    %c0_19 = arith.constant 0 : index
    %c3 = arith.constant 3 : index
    %c0_20 = arith.constant 0 : index
    %c0_21 = arith.constant 0 : index
    %c0_22 = arith.constant 0 : index
    %22 = vector.load %arg5[%c0_19, %c3, %c0_20, %c0_21, %c0_22] : memref<1x4x1x8x8xf32, #tpu.memory_space<vmem>>, vector<1x1x1x8x8xf32>
    %23 = vector.shape_cast %22 : vector<1x1x1x8x8xf32> to vector<8x8xf32>
    %24 = vector.shape_cast %21 : vector<8x8xf32> to vector<1x1x1x8x8xf32>
    tpu.vector_store %arg5[%c0_19, %c3, %c0_20, %c0_21, %c0_22], %24 {strides = array<i32>} : memref<1x4x1x8x8xf32, #tpu.memory_space<vmem>>, vector<1x1x1x8x8xf32>,
    return
  }
  func.func @transform_0(%arg0: i32, %arg1: i32, %arg2: i32) -> (i32, i32, i32, i32) {
    %c0_i32 = arith.constant 0 : i32
    %c0_i32_0 = arith.constant 0 : i32
    return %arg0, %arg1, %arg2, %c0_i32 : i32, i32, i32, i32
  }
  func.func @transform_1(%arg0: i32, %arg1: i32, %arg2: i32) -> (i32, i32) {
    %c0_i32 = arith.constant 0 : i32
    %c0_i32_0 = arith.constant 0 : i32
    %c0_i32_1 = arith.constant 0 : i32
    return %c0_i32, %c0_i32_0 : i32, i32
  }
  func.func @transform_2(%arg0: i32, %arg1: i32, %arg2: i32) -> (i32, i32, i32, i32, i32) {
    %c0_i32 = arith.constant 0 : i32
    %c0_i32_0 = arith.constant 0 : i32
    %c0_i32_1 = arith.constant 0 : i32
    return %arg0, %c0_i32, %arg1, %arg2, %c0_i32_0 : i32, i32, i32, i32, i32
  }
}

</mosaic_0001>

<llo_original>
// kernel: dwt_forward.1
$region0: #{dwt_forward.1}
  #allocation0 [shape = 'u32[]', space=smem, size = 0x4, offset = 0x4, fixed_abs, tag = 'smem constant byte address 0x4 - core index']
  #allocation1 [shape = 'u32[144,128]{1,0:T(1,128)}', space=vmem, size = 0x12000, scoped, tag = 'internal scratch']
  %s0 = inlined_call_operand.vmem [shape: f32[2,4,8,32], index: 0, kind: input, shape index: {}]
  %s1 = inlined_call_operand.vmem [shape: f32[16,16], index: 1, kind: input, shape index: {}]
  %s2 = inlined_call_operand.vmem [shape: f32[2,4,4,8,8], index: 2, kind: output, shape index: {}]
  %s3 = sld [smem:[#allocation0]]
  $region75: #{dwt_forward.1} parent=0
    _
  %s5 = ssub.s32 1, %s3
  %s6 = scalar_select 0, %s5, %s3
  $region1: #{dwt_forward.1} parent=0
    #allocation2 [shape = 'u8[32768]{0}', space=vmem, size = 0x8000, scoped, tag = 'output window, operand 0']
    loop: start=0, step=1, limit=10
    $region2: #{dwt_forward.1} parent=1 // loop_pre_header
      _
    $region3: #{dwt_forward.1} parent=1 // loop_header
      %s8 = sphi 0, %s12
      %p9 = scmp.ge.s32.totalorder %s8, 10
      %s15 = sphi 0, %s34
      %s16 = sphi 0, %s30
      %s17 = sphi 0, %s26
      %s18 = sphi 0, %s15
      %s19 = sphi 0, %s16
      %s20 = sphi 0, %s17
      %s21 = sphi 0, %s18
      %s22 = sphi 0, %s19
      %s23 = sphi 0, %s20
      %s41 = sphi 0, %s43
      %s44 = sphi 0, %s41
      %s45 = sphi 0, %s44
      %s61 = sphi 0, %s45
      %s65 = sphi 0, %s65
      %s67 = sphi 0, %s65
      %s68 = sphi 0, %s67
      %s82 = sphi 0, %s68
      %s92 = sphi 0, %s94
      %s95 = sphi 0, %s92
      %s96 = sphi 0, %s95
      %s112 = sphi 0, %s96
    $region4: #{dwt_forward.1} parent=1 // loop_header_branch
      %11 = sbr.rel (%p9) target = $region8
    $region5: #{dwt_forward.1} parent=1 // loop_body
      %s13 = ssub.s32 %s8, 1
      %s14 = ssub.s32 %s8, 2
      %s24 = sadd.s32 1, %s17
      %p25 = scmp.ge.s32.totalorder %s24, 1
      %s26 = scalar_select %p25, 0, %s24
      %s27 = sadd.s32 1, %s16
      %s28 = scalar_select %p25, %s27, %s16
      %p29 = scmp.ge.s32.totalorder %s28, 4
      %s30 = scalar_select %p29, 0, %s28
      %s31 = sadd.s32 1, %s15
      %s32 = scalar_select %p29, %s31, %s15
      %p33 = scmp.ge.s32.totalorder %s32, 2
      %s34 = scalar_select %p33, 0, %s32
      %s35 = ssub.s32 %s15, %s34
      %s36 = ssub.s32 %s16, %s30
      %s37 = sor.u32 %s35, %s36
      %s38 = ssub.s32 %s17, %s26
      %s39 = sor.u32 %s37, %s38
      %p40 = scmp.eq.s32.totalorder %s39, 0
      %s42 = sadd.s32 %s41, 1
      %s43 = scalar_select %p40, %s41, %s42
      %p46 = pneg %p40
      %p47 = scmp.eq.s32.totalorder %s8, 7
      %p48 = por %p46, %p47
      %p49 = scmp.ne.s32.totalorder %s41, %s44
      %p50 = scmp.eq.s32.totalorder %s8, 0
      %p51 = por %p49, %p50
      %p52 = scmp.ne.s32.totalorder %s41, %s44
      %p53 = scmp.eq.s32.totalorder %s13, 7
      %p54 = por %p52, %p53
      %p55 = scmp.ne.s32.totalorder %s44, %s45
      %p56 = scmp.eq.s32.totalorder %s13, 0
      %p57 = por %p55, %p56
      %p58 = scmp.ne.s32.totalorder %s44, %s45
      %p59 = scmp.eq.s32.totalorder %s14, 7
      %p60 = por %p58, %p59
      %p62 = scmp.ne.s32.totalorder %s45, %s61
      %p63 = scmp.eq.s32.totalorder %s14, 0
      %p64 = por %p62, %p63
      %s66 = sadd.s32 %s65, 1
      %p69 = scmp.eq.s32.totalorder %s8, 7
      %p70 = scmp.ne.s32.totalorder %s65, %s67
      %p71 = scmp.eq.s32.totalorder %s8, 0
      %p72 = por %p70, %p71
      %p73 = scmp.ne.s32.totalorder %s65, %s67
      %p74 = scmp.eq.s32.totalorder %s13, 7
      %p75 = por %p73, %p74
      %p76 = scmp.ne.s32.totalorder %s67, %s68
      %p77 = scmp.eq.s32.totalorder %s13, 0
      %p78 = por %p76, %p77
      %p79 = scmp.ne.s32.totalorder %s67, %s68
      %p80 = scmp.eq.s32.totalorder %s14, 7
      %p81 = por %p79, %p80
      %p83 = scmp.ne.s32.totalorder %s68, %s82
      %p84 = scmp.eq.s32.totalorder %s14, 0
      %p85 = por %p83, %p84
      %s86 = ssub.s32 %s15, %s34
      %s87 = ssub.s32 %s16, %s30
      %s88 = sor.u32 %s86, %s87
      %s89 = ssub.s32 %s17, %s26
      %s90 = sor.u32 %s88, %s89
      %p91 = scmp.eq.s32.totalorder %s90, 0
      %s93 = sadd.s32 %s92, 1
      %s94 = scalar_select %p91, %s92, %s93
      %p97 = pneg %p91
      %p98 = scmp.eq.s32.totalorder %s8, 7
      %p99 = por %p97, %p98
      %p100 = scmp.ne.s32.totalorder %s92, %s95
      %p101 = scmp.eq.s32.totalorder %s8, 0
      %p102 = por %p100, %p101
      %p103 = scmp.ne.s32.totalorder %s92, %s95
      %p104 = scmp.eq.s32.totalorder %s13, 7
      %p105 = por %p103, %p104
      %p106 = scmp.ne.s32.totalorder %s95, %s96
      %p107 = scmp.eq.s32.totalorder %s13, 0
      %p108 = por %p106, %p107
      %p109 = scmp.ne.s32.totalorder %s95, %s96
      %p110 = scmp.eq.s32.totalorder %s14, 7
      %p111 = por %p109, %p110
      %p113 = scmp.ne.s32.totalorder %s96, %s112
      %p114 = scmp.eq.s32.totalorder %s14, 0
      %p115 = por %p113, %p114
      %p116 = scmp.le.s32.totalorder 1, %s8
      %p117 = scmp.lt.s32.totalorder %s8, 9
      %p118 = pnand %p116, %p117
      %p119 = pneg %p118
      // Predicated region
      $region9: #{dwt_forward.1} parent=5 // pred_check
        _
      $region10: #{dwt_forward.1} parent=5 // pred_check_branch
        %121 = sbr.rel (%p118) target = $region12
      $region11: #{dwt_forward.1} parent=5 // pred_region
        %s122 = ssub.s32 %s8, 1
        // Predicated region
        $region13: #{dwt_forward.1} parent=11 // pred_check
          %p123 = pneg %p78
        $region14: #{dwt_forward.1} parent=11 // pred_check_branch
          %125 = sbr.rel (%p123) target = $region16
        $region15: #{dwt_forward.1} parent=11 // pred_region
          _
        $region16: #{dwt_forward.1} parent=11 // pred_fallthru
          _
      $region12: #{dwt_forward.1} parent=5 // pred_fallthru
        _
      %p126 = scmp.lt.s32.totalorder %s8, 8
      // Predicated region
      $region17: #{dwt_forward.1} parent=5 // pred_check
        %p127 = pneg %p126
      $region18: #{dwt_forward.1} parent=5 // pred_check_branch
        %129 = sbr.rel (%p127) target = $region20
      $region19: #{dwt_forward.1} parent=5 // pred_region
        // Predicated region
        $region21: #{dwt_forward.1} parent=19 // pred_check
          %p130 = pneg %p51
        $region22: #{dwt_forward.1} parent=19 // pred_check_branch
          %132 = sbr.rel (%p130) target = $region24
        $region23: #{dwt_forward.1} parent=19 // pred_region
          %p133 = scmp.lt.s32.totalorder %s15, 1
          %s134 = scalar_select %p133, %s15, 1
          %p135 = scmp.lt.s32.totalorder %s16, 3
          %s136 = scalar_select %p135, %s16, 3
          %p137 = scmp.lt.s32.totalorder %s17, 0
          %s138 = scalar_select %p137, %s17, 0
          %s139 = sadd.s32 %s138, %s136
          %s140 = smul.addr %s134, 4
          %s141 = sadd.s32 %s139, %s140
          %s142 = smul.addr %s141, 8
          %s143 = scalar_lea.vmem %s0, %s142
        $region24: #{dwt_forward.1} parent=19 // pred_fallthru
          _
      $region20: #{dwt_forward.1} parent=5 // pred_fallthru
        _
      %p144 = scmp.le.s32.totalorder 1, %s8
      %p145 = scmp.lt.s32.totalorder %s8, 9
      %p146 = pnand %p144, %p145
      %p147 = pneg %p146
      // Predicated region
      $region25: #{dwt_forward.1} parent=5 // pred_check
        _
      $region26: #{dwt_forward.1} parent=5 // pred_check_branch
        %149 = sbr.rel (%p146) target = $region28
      $region27: #{dwt_forward.1} parent=5 // pred_region
        %s150 = ssub.s32 %s8, 1
        %p151 = scmp.lt.s32.totalorder %s18, 1
        %s152 = scalar_select %p151, %s18, 1
        %p153 = scmp.lt.s32.totalorder %s19, 3
        %s154 = scalar_select %p153, %s19, 3
        %p155 = scmp.lt.s32.totalorder %s20, 0
        %s156 = scalar_select %p155, %s20, 0
        %s157 = sadd.s32 %s156, %s154
        %s158 = smul.addr %s152, 4
        %s159 = sadd.s32 %s157, %s158
        %s160 = smul.addr %s159, 8
        %s161 = scalar_lea.vmem %s0, %s160
        %p162 = pneg %p57
        %p163 = pneg %p54
        %p164 = pneg %p78
        %p165 = pneg %p75
        %p166 = pneg %p108
        %p167 = pneg %p105
        %s168 = sand.u32 %s95, 1
        %s169 = sand.u32 %s95, 1
        %s170 = smul.addr %s169, 32
        %s171 = scalar_lea.vmem [#allocation2], %s170
        %p172 = scmp.lt.s32.totalorder %s18, 1
        %s173 = scalar_select %p172, %s18, 1
        %p174 = scmp.lt.s32.totalorder %s19, 3
        %s175 = scalar_select %p174, %s19, 3
        %p176 = scmp.lt.s32.totalorder %s20, 0
        %s177 = scalar_select %p176, %s20, 0
        %s178 = sadd.s32 %s177, %s175
        %s179 = smul.addr %s173, 4
        %s180 = sadd.s32 %s178, %s179
        %s181 = smul.addr %s180, 8
        %s182 = scalar_lea.vmem %s0, %s181
        %v183 = vld [vmem:[%s182] sm:$0xff]
        %185 = vrot.lane.b32.xlu0 %v183, 112
        %v186 = vpop.permute.xlu0 %185
        %v188 = vadd.f32 %v183, %v186
        %189 = vrot.lane.b32.xlu0 %v183, 16
        %v190 = vpop.permute.xlu0 %189
        %v192 = vsub.f32 %v183, %v190
        %v193 = vld [vmem:[%s1] sm:$0xff]
        %v194 = vld [vmem:[%s1 + $0x8] sm:$0xff]
        %vm195 = vcmask 130048
        %v197 = vsel %vm195, %v188, 0
        %199 = vmatprep.subr.mxu0 0.0
        %200 = vmatpush1.msra.mxu0 %v193
        %201 = vmatprep.subr.mxu0 0.0
        %202 = vmatpush1.msra.mxu0 %v194
        %203 = vmatprep.subr.mxu0 0.0
        %204 = vmatpush1.msra.mxu0 0.0
        %205 = vmatprep.subr.mxu0 0.0
        %206 = vmatpush1.msra.mxu0 0.0
        %207 = vmatprep.subr.mxu0 0.0
        %208 = vmatpush1.msra.mxu0 0.0
        %209 = vmatprep.subr.mxu0 0.0
        %210 = vmatpush1.msra.mxu0 0.0
        %211 = vmatprep.subr.mxu0 0.0
        %212 = vmatpush1.msra.mxu0 0.0
        %213 = vmatprep.subr.mxu0 0.0
        %214 = vmatpush1.msra.mxu0 0.0
        %215 = vmatprep.subr.mxu0 0.0
        %216 = vmatpush1.msra.mxu0 0.0
        %217 = vmatprep.subr.mxu0 0.0
        %218 = vmatpush1.msra.mxu0 0.0
        %219 = vmatprep.subr.mxu0 0.0
        %220 = vmatpush1.msra.mxu0 0.0
        %221 = vmatprep.subr.mxu0 0.0
        %222 = vmatpush1.msra.mxu0 0.0
        %223 = vmatprep.subr.mxu0 0.0
        %224 = vmatpush1.msra.mxu0 0.0
        %225 = vmatprep.subr.mxu0 0.0
        %226 = vmatpush1.msra.mxu0 0.0
        %227 = vmatprep.subr.mxu0 0.0
        %228 = vmatpush1.msra.mxu0 0.0
        %229 = vmatprep.subr.mxu0 0.0
        %230 = vmatpush1.msra.mxu0 0.0
        %231 = vmatprep.subr.mxu0 0.0
        %232 = vmatpush1.msra.mxu0 0.0
        %233 = vmatprep.subr.mxu0 0.0
        %234 = vmatpush1.msra.mxu0 0.0
        %235 = vmatprep.subr.mxu0 0.0
        %236 = vmatpush1.msra.mxu0 0.0
        %237 = vmatprep.subr.mxu0 0.0
        %238 = vmatpush1.msra.mxu0 0.0
        %239 = vmatprep.subr.mxu0 0.0
        %240 = vmatpush1.msra.mxu0 0.0
        %241 = vmatprep.subr.mxu0 0.0
        %242 = vmatpush1.msra.mxu0 0.0
        %243 = vmatprep.subr.mxu0 0.0
        %244 = vmatpush1.msra.mxu0 0.0
        %245 = vmatprep.subr.mxu0 0.0
        %246 = vmatpush1.msra.mxu0 0.0
        %247 = vmatprep.subr.mxu0 0.0
        %248 = vmatpush1.msra.mxu0 0.0
        %249 = vmatprep.subr.mxu0 0.0
        %250 = vmatpush1.msra.mxu0 0.0
        %251 = vmatprep.subr.mxu0 0.0
        %252 = vmatpush1.msra.mxu0 0.0
        %253 = vmatprep.subr.mxu0 0.0
        %254 = vmatpush1.msra.mxu0 0.0
        %255 = vmatprep.subr.mxu0 0.0
        %256 = vmatpush1.msra.mxu0 0.0
        %257 = vmatprep.subr.mxu0 0.0
        %258 = vmatpush1.msra.mxu0 0.0
        %259 = vmatprep.subr.mxu0 0.0
        %260 = vmatpush1.msra.mxu0 0.0
        %261 = vmatprep.subr.mxu0 0.0
        %262 = vmatpush1.msra.mxu0 0.0
        %263 = vmatprep.mubr.f32.mxu0 0.0
        %264 = vmatmul.mubr.f32.gmra.mrb[0].mxu0 %v197
        %v265 = vpop.f32.mrb[0].mxu0
        %v266 = vadd.f32 0.0, %v265
        %v267 = vpop.f32.mrb[0].mxu0
        %268 = vdwg.mxu0
        %270 = vrot.lane.b32.xlu0 %v192, 112
        %v271 = vpop.permute.xlu0 %270
        %v272 = vsel %vm195, %v271, 0
        %274 = vmatprep.subr.mxu0 0.0
        %275 = vmatpush1.msra.mxu0 %v193
        %276 = vmatprep.subr.mxu0 0.0
        %277 = vmatpush1.msra.mxu0 %v194
        %278 = vmatprep.subr.mxu0 0.0
        %279 = vmatpush1.msra.mxu0 0.0
        %280 = vmatprep.subr.mxu0 0.0
        %281 = vmatpush1.msra.mxu0 0.0
        %282 = vmatprep.subr.mxu0 0.0
        %283 = vmatpush1.msra.mxu0 0.0
        %284 = vmatprep.subr.mxu0 0.0
        %285 = vmatpush1.msra.mxu0 0.0
        %286 = vmatprep.subr.mxu0 0.0
        %287 = vmatpush1.msra.mxu0 0.0
        %288 = vmatprep.subr.mxu0 0.0
        %289 = vmatpush1.msra.mxu0 0.0
        %290 = vmatprep.subr.mxu0 0.0
        %291 = vmatpush1.msra.mxu0 0.0
        %292 = vmatprep.subr.mxu0 0.0
        %293 = vmatpush1.msra.mxu0 0.0
        %294 = vmatprep.subr.mxu0 0.0
        %295 = vmatpush1.msra.mxu0 0.0
        %296 = vmatprep.subr.mxu0 0.0
        %297 = vmatpush1.msra.mxu0 0.0
        %298 = vmatprep.subr.mxu0 0.0
        %299 = vmatpush1.msra.mxu0 0.0
        %300 = vmatprep.subr.mxu0 0.0
        %301 = vmatpush1.msra.mxu0 0.0
        %302 = vmatprep.subr.mxu0 0.0
        %303 = vmatpush1.msra.mxu0 0.0
        %304 = vmatprep.subr.mxu0 0.0
        %305 = vmatpush1.msra.mxu0 0.0
        %306 = vmatprep.subr.mxu0 0.0
        %307 = vmatpush1.msra.mxu0 0.0
        %308 = vmatprep.subr.mxu0 0.0
        %309 = vmatpush1.msra.mxu0 0.0
        %310 = vmatprep.subr.mxu0 0.0
        %311 = vmatpush1.msra.mxu0 0.0
        %312 = vmatprep.subr.mxu0 0.0
        %313 = vmatpush1.msra.mxu0 0.0
        %314 = vmatprep.subr.mxu0 0.0
        %315 = vmatpush1.msra.mxu0 0.0
        %316 = vmatprep.subr.mxu0 0.0
        %317 = vmatpush1.msra.mxu0 0.0
        %318 = vmatprep.subr.mxu0 0.0
        %319 = vmatpush1.msra.mxu0 0.0
        %320 = vmatprep.subr.mxu0 0.0
        %321 = vmatpush1.msra.mxu0 0.0
        %322 = vmatprep.subr.mxu0 0.0
        %323 = vmatpush1.msra.mxu0 0.0
        %324 = vmatprep.subr.mxu0 0.0
        %325 = vmatpush1.msra.mxu0 0.0
        %326 = vmatprep.subr.mxu0 0.0
        %327 = vmatpush1.msra.mxu0 0.0
        %328 = vmatprep.subr.mxu0 0.0
        %329 = vmatpush1.msra.mxu0 0.0
        %330 = vmatprep.subr.mxu0 0.0
        %331 = vmatpush1.msra.mxu0 0.0
        %332 = vmatprep.subr.mxu0 0.0
        %333 = vmatpush1.msra.mxu0 0.0
        %334 = vmatprep.subr.mxu0 0.0
        %335 = vmatpush1.msra.mxu0 0.0
        %336 = vmatprep.subr.mxu0 0.0
        %337 = vmatpush1.msra.mxu0 0.0
        %338 = vmatprep.mubr.f32.mxu0 0.0
        %339 = vmatmul.mubr.f32.gmra.mrb[0].mxu0 %v272
        %v340 = vpop.f32.mrb[0].mxu0
        %v341 = vadd.f32 0.0, %v340
        %v342 = vpop.f32.mrb[0].mxu0
        %343 = vdwg.mxu0
        %vm344 = vcmask 64512
        %345 = vst.msk [vmem:[%s171] sm:$0xff] %vm344, %v266
        %347 = vrot.lane.b32.xlu0 %v266, 120
        %v348 = vpop.permute.xlu0 %347
        %s350 = scalar_lea.vmem %s171, 8 [#allocation2]
        %351 = vst.msk [vmem:[%s350] sm:$0xff] %vm344, %v348
        %s352 = scalar_lea.vmem %s171, 16 [#allocation2]
        %353 = vst.msk [vmem:[%s352] sm:$0xff] %vm344, %v341
        %355 = vrot.lane.b32.xlu0 %v341, 120
        %v356 = vpop.permute.xlu0 %355
        %s358 = scalar_lea.vmem %s171, 24 [#allocation2]
        %359 = vst.msk [vmem:[%s358] sm:$0xff] %vm344, %v356
        %s360 = sand.u32 %s95, 1
        %s361 = sand.u32 %s95, 1
        %s362 = smul.addr %s361, 32
        %s363 = scalar_lea.vmem [#allocation2], %s362
        // Predicated region
        $region29: #{dwt_forward.1} parent=27 // pred_check
          %p364 = pneg %p105
        $region30: #{dwt_forward.1} parent=27 // pred_check_branch
          %366 = sbr.rel (%p364) target = $region32
        $region31: #{dwt_forward.1} parent=27 // pred_region
          %s367 = sadd.s32 %s20, %s19
          %s368 = smul.addr %s18, 16
          %s369 = sadd.s32 %s367, %s368
          %s370 = smul.addr %s369, 8
          %s371 = scalar_lea.vmem %s2, %s370
          // Predicated region
          $region33: #{dwt_forward.1} parent=31 // pred_check
            _
          $region34: #{dwt_forward.1} parent=31 // pred_check_branch
            %373 = sbr.rel (0) target = $region36
          $region35: #{dwt_forward.1} parent=31 // pred_region
            // Predicated region
            $region37: #{dwt_forward.1} parent=35 // pred_check
              _
            $region38: #{dwt_forward.1} parent=35 // pred_check_branch
              %375 = sbr.rel (0) target = $region40
            $region39: #{dwt_forward.1} parent=35 // pred_region
              // Predicated region
              $region52: #{dwt_forward.1} parent=39 // pred_check
                _
              $region53: #{dwt_forward.1} parent=39 // pred_check_branch
                %396 = sbr.rel (0) target = $region55
              $region54: #{dwt_forward.1} parent=39 // pred_region
                loop: start=0, step=1, limit=1
                $region56: #{dwt_forward.1} parent=54 // loop_pre_header
                  _
                $region57: #{dwt_forward.1} parent=54 // loop_header
                  %s398 = sphi 0, %s402
                  %p399 = scmp.ge.s32.totalorder %s398, 1
                  %s403 = sphi %s363, %s363
                  %s404 = sphi %s371, %s371
                $region58: #{dwt_forward.1} parent=54 // loop_header_branch
                  %401 = sbr.rel (%p399) target = $region62
                $region59: #{dwt_forward.1} parent=54 // loop_body
                  %v405 = vld [vmem:[%s403] sm:$0xff]
                  %406 = vst [vmem:[%s404] sm:$0xff] %v405
                  %v407 = vld [vmem:[%s403 + $0x8] sm:$0xff]
                  %408 = vst [vmem:[%s404 + $0x20] sm:$0xff] %v407
                  %v409 = vld [vmem:[%s403 + $0x10] sm:$0xff]
                  %410 = vst [vmem:[%s404 + $0x40] sm:$0xff] %v409
                  %v411 = vld [vmem:[%s403 + $0x18] sm:$0xff]
                  %412 = vst [vmem:[%s404 + $0x60] sm:$0xff] %v411
                $region60: #{dwt_forward.1} parent=54 // loop_footer
                  %s402 = sadd.s32 1, %s398
                $region61: #{dwt_forward.1} parent=54 // loop_footer_branch
                  %397 = sbr.rel target = $region57
                $region62: #{dwt_forward.1} parent=54 // loop_exit
                  _
              $region55: #{dwt_forward.1} parent=39 // pred_fallthru
                _
              // Predicated region
              $region63: #{dwt_forward.1} parent=39 // pred_check
                _
              $region64: #{dwt_forward.1} parent=39 // pred_check_branch
                %414 = sbr.rel target = $region66
              $region65: #{dwt_forward.1} parent=39 // pred_region
                _
              $region66: #{dwt_forward.1} parent=39 // pred_fallthru
                _
            $region40: #{dwt_forward.1} parent=35 // pred_fallthru
              _
            // Predicated region
            $region41: #{dwt_forward.1} parent=35 // pred_check
              _
            $region42: #{dwt_forward.1} parent=35 // pred_check_branch
              %377 = sbr.rel target = $region44
            $region43: #{dwt_forward.1} parent=35 // pred_region
              loop: start=0, step=1, limit=1
              $region45: #{dwt_forward.1} parent=43 // loop_pre_header
                _
              $region46: #{dwt_forward.1} parent=43 // loop_header
                %s380 = sphi 0, %s384
                %p381 = scmp.ge.s32.totalorder %s380, 1
                %s385 = sphi %s363, %s363
                %s386 = sphi %s371, %s371
              $region47: #{dwt_forward.1} parent=43 // loop_header_branch
                %383 = sbr.rel (%p381) target = $region51
              $region48: #{dwt_forward.1} parent=43 // loop_body
                %v387 = vld [vmem:[%s385] sm:$0xff]
                %388 = vst [vmem:[%s386] sm:$0xff] %v387
                %v389 = vld [vmem:[%s385 + $0x8] sm:$0xff]
                %390 = vst [vmem:[%s386 + $0x20] sm:$0xff] %v389
                %v391 = vld [vmem:[%s385 + $0x10] sm:$0xff]
                %392 = vst [vmem:[%s386 + $0x40] sm:$0xff] %v391
                %v393 = vld [vmem:[%s385 + $0x18] sm:$0xff]
                %394 = vst [vmem:[%s386 + $0x60] sm:$0xff] %v393
              $region49: #{dwt_forward.1} parent=43 // loop_footer
                %s384 = sadd.s32 1, %s380
              $region50: #{dwt_forward.1} parent=43 // loop_footer_branch
                %379 = sbr.rel target = $region46
              $region51: #{dwt_forward.1} parent=43 // loop_exit
                _
            $region44: #{dwt_forward.1} parent=35 // pred_fallthru
              _
          $region36: #{dwt_forward.1} parent=31 // pred_fallthru
            _
          %415 = vnop
        $region32: #{dwt_forward.1} parent=27 // pred_fallthru
          _
      $region28: #{dwt_forward.1} parent=5 // pred_fallthru
        _
      %p416 = scmp.le.s32.totalorder 2, %s8
      // Predicated region
      $region67: #{dwt_forward.1} parent=5 // pred_check
        %p417 = pneg %p416
      $region68: #{dwt_forward.1} parent=5 // pred_check_branch
        %419 = sbr.rel (%p417) target = $region70
      $region69: #{dwt_forward.1} parent=5 // pred_region
        %s420 = ssub.s32 %s8, 2
        // Predicated region
        $region71: #{dwt_forward.1} parent=69 // pred_check
          %p421 = pneg %p111
        $region72: #{dwt_forward.1} parent=69 // pred_check_branch
          %423 = sbr.rel (%p421) target = $region74
        $region73: #{dwt_forward.1} parent=69 // pred_region
          %s424 = sand.u32 %s96, 1
          %s425 = sand.u32 %s96, 1
          %s426 = smul.addr %s425, 32
          %s427 = scalar_lea.vmem [#allocation2], %s426
        $region74: #{dwt_forward.1} parent=69 // pred_fallthru
          _
      $region70: #{dwt_forward.1} parent=5 // pred_fallthru
        _
    $region6: #{dwt_forward.1} parent=1 // loop_footer
      %s12 = sadd.s32 1, %s8
    $region7: #{dwt_forward.1} parent=1 // loop_footer_branch
      %7 = sbr.rel target = $region3
    $region8: #{dwt_forward.1} parent=1 // loop_exit
      _

</llo_original>
